<compile_context>
chip_gen: v7x
topology: tpu7x:2x2x1
jax: 0.10.0
libtpu: 0.0.40
codegen_flags: <defaults>
</compile_context>

<pallas_src>
import jax
import jax.numpy as jnp
import numpy as np
from jax import lax
from jax.experimental import pallas as pl
from jax.experimental.pallas import tpu as pltpu


# ----------------------------------------------------------------------------
# Host-side (once-per-weights) structural-matrix precompute
# ----------------------------------------------------------------------------
def _interp_matrix_np(in_size: int, out_size: int) -> np.ndarray:
    """1-D bilinear-resize matrix, align_corners=True (matches F.interpolate)."""
    o = np.arange(out_size, dtype=np.float64)
    s = np.zeros_like(o) if out_size == 1 else o * (in_size - 1) / (out_size - 1)
    low = np.clip(np.floor(s).astype(np.int64), 0, in_size - 1)
    high = np.clip(low + 1, 0, in_size - 1)
    frac = (s - low).astype(np.float32)
    m = np.zeros((out_size, in_size), dtype=np.float32)
    m[np.arange(out_size), low] += (1.0 - frac)
    m[np.arange(out_size), high] += frac
    return m


def build_upconv_params(w_oihw, bias, H, W):
    """Precompute structural matrices once per (weights, H, W); returns arrays:

      ckron  (W*C,   W2*C)    column bilinear interp on the flat (w, c) lanes
      rmat3  (3*H2,  H)       three vertically-shifted, zero-padded row-interp mats
      wfused (3*W2*C, W2*OC)  the three banded 3x3-conv matrices stacked along K
      b_row  (1,     W2*OC)   bias tiled across W2 (lane-dense)
    """
    w = np.asarray(w_oihw, dtype=np.float32)            # (OC, C, 3, 3)
    b = np.asarray(bias, dtype=np.float32)              # (OC,)
    OC, C = w.shape[0], w.shape[1]
    H2, W2 = 2 * H, 2 * W
    w_hwio = np.transpose(w, (2, 3, 1, 0))              # (3, 3, C, OC)

    rmat = _interp_matrix_np(H, H2)                     # (H2, H)
    cmat = _interp_matrix_np(W, W2)                     # (W2, W)

    # Vertical conv padding folded in: one zero row above/below the row-interp,
    # then stack the three 1-row-shifted windows along M (row-block k = band k).
    rmat_p = np.zeros((H2 + 2, H), np.float32)
    rmat_p[1:H2 + 1] = rmat
    rmat3 = np.concatenate([rmat_p[k:k + H2] for k in range(3)], axis=0)  # (3*H2, H)

    # Column interp acting on the flattened (w, c) lane axis.
    ckron = np.kron(cmat.T, np.eye(C, dtype=np.float32))                  # (W*C, W2*C)

    # Banded conv matrices (horizontal padding folded in by dropping the
    # out-of-range diagonals), concatenated along K so the kernel does ONE
    # K = 3*W2*C matmul instead of 3x K = W2*C matmuls + 2 VPU adds.
    wband = np.stack([
        sum(np.kron(np.eye(W2, k=1 - kx, dtype=np.float32), w_hwio[ky, kx])
            for kx in range(3))
        for ky in range(3)
    ])                                                                    # (3, W2*C, W2*OC)
    wfused = wband.reshape(3 * W2 * C, W2 * OC)

    b_row = np.tile(b, W2).reshape(1, W2 * OC)

    return (jnp.asarray(ckron), jnp.asarray(rmat3),
            jnp.asarray(wfused), jnp.asarray(b_row))


# ----------------------------------------------------------------------------
# Kernel
# ----------------------------------------------------------------------------
def _upconv_kernel(x_ref, ckron_ref, rmat3_ref, wfused_ref, b_ref, o_ref, lhs_ref):
    # x_ref:      (Bt, H, W*C)       Bt images, channels folded into lanes
    # ckron_ref:  (W*C, W2*C)        column-interp matrix
    # rmat3_ref:  (3*H2, H)          shifted/zero-padded row-interp matrices
    # wfused_ref: (3*W2*C, W2*OC)    fused banded conv weights
    # b_ref:      (1, W2*OC)         lane-dense bias
    # o_ref:      (Bt, H2, W2*OC)    lane-dense output
    # lhs_ref:    VMEM (Bt*H2, 3*W2*C) scratch holding the fused-matmul LHS
    Bt, H, WC = x_ref.shape
    H2 = o_ref.shape[1]
    W2OC = o_ref.shape[2]
    W2C = ckron_ref.shape[1]

    # -- stage 1: column bilinear interp, batched over all Bt images (M = Bt*H)
    x2d = x_ref[...].reshape(Bt * H, WC)
    t = jnp.dot(x2d, ckron_ref[...],
                preferred_element_type=jnp.float32)                  # (Bt*H, W2C)

    # -- stage 2: row interp + vertical zero-pad + band shift.  One M = 3*H2
    #    matmul per image; the three row-blocks are scattered into the fused-LHS
    #    scratch at 8/128-aligned offsets (no +1/+2 sublane value slicing).
    rmat3 = rmat3_ref[...]
    for bidx in range(Bt):                    # static unroll, Bt is small
        u3 = jnp.dot(rmat3, t[bidx * H:(bidx + 1) * H, :],
                     preferred_element_type=jnp.float32)             # (3*H2, W2C)
        for k in range(3):
            lhs_ref[bidx * H2:(bidx + 1) * H2, k * W2C:(k + 1) * W2C] = \
                u3[k * H2:(k + 1) * H2, :]

    # -- stage 3: 3x3 conv as ONE fused matmul, M = Bt*H2, K = 3*W2*C
    acc = jnp.dot(lhs_ref[...], wfused_ref[...],
                  preferred_element_type=jnp.float32)                # (Bt*H2, W2*OC)
    out = acc + b_ref[...]                                           # f32 epilogue
    o_ref[...] = out.reshape(Bt, H2, W2OC).astype(o_ref.dtype)       # full-lane store


# ----------------------------------------------------------------------------
# Wrapper
# ----------------------------------------------------------------------------
def _pick_batch_tile(B: int) -> int:
    # Largest divisor of B that is <= 8, preferring to keep >= 2 grid steps so
    # both v7x TensorCores get work (harmless on single-TC v5e/v6e).
    divisors = [d for d in range(1, min(B, 8) + 1) if B % d == 0]
    two_step = [d for d in divisors if B // d >= 2]
    return max(two_step) if two_step else max(divisors)


def _vmem_limit_bytes(Bt, H, WC, H2, W2C, W2OC) -> int:
    f32 = 4
    # Pipelined operands are double-buffered by default; scratch is single.
    per_buf = (Bt * H * WC + WC * W2C + 3 * H2 * H + 3 * W2C * W2OC + W2OC
               + Bt * H2 * W2OC) * f32
    scratch = Bt * H2 * 3 * W2C * f32
    est = 2 * per_buf + scratch
    # 50% headroom, floor at the v6e default, cap at v7x physical VMEM.
    return int(min(max(int(est * 1.5), 32 << 20), 64 << 20))


@jax.jit
def _upconv_apply(x_nchw, ckron, rmat3, wfused, b_row):
    B, C, H, W = x_nchw.shape
    H2, W2 = 2 * H, 2 * W
    WC = W * C
    W2C = ckron.shape[1]
    W2OC = wfused.shape[1]
    OC = W2OC // W2

    Bt = _pick_batch_tile(B)
    grid = (B // Bt,)

    # NCHW -> (B, H, W*C): channels folded into the lane axis (lane-dense).
    x_flat = jnp.transpose(x_nchw, (0, 2, 3, 1)).reshape(B, H, WC)
    x_flat = x_flat.astype(jnp.float32)

    out_flat = pl.pallas_call(
        _upconv_kernel,
        out_shape=jax.ShapeDtypeStruct((B, H2, W2OC), jnp.float32),
        grid=grid,
        in_specs=[
            pl.BlockSpec((Bt, H, WC), lambda i: (i, 0, 0)),
            # Constant operands (constant index_map -> DMA'd once).
            pl.BlockSpec((WC, W2C), lambda i: (0, 0)),
            pl.BlockSpec((3 * H2, H), lambda i: (0, 0)),
            pl.BlockSpec((3 * W2C, W2OC), lambda i: (0, 0)),
            pl.BlockSpec((1, W2OC), lambda i: (0, 0)),
        ],
        out_specs=pl.BlockSpec((Bt, H2, W2OC), lambda i: (i, 0, 0)),
        scratch_shapes=[pltpu.VMEM((Bt * H2, 3 * W2C), jnp.float32)],
        compiler_params=pltpu.CompilerParams(
            dimension_semantics=("parallel",),
            vmem_limit_bytes=_vmem_limit_bytes(Bt, H, WC, H2, W2C, W2OC)),
    )(x_flat, ckron, rmat3, wfused, b_row)

    out_nhwc = out_flat.reshape(B, H2, W2, OC)                       # free reshape
    return jnp.transpose(out_nhwc, (0, 3, 1, 2))                     # back to NCHW


def upconv_pallas(x_nchw, w_oihw, bias, scale=2):
    """Forward of UpConv. x_nchw: (B, C, H, W) f32. Returns (B, OC, 2H, 2W)."""
    assert scale == 2, "UpConv.forward hardcodes scale_factor=2"
    H, W = int(x_nchw.shape[2]), int(x_nchw.shape[3])
    # Hoisted precompute: in a real model, cache this per (weights, H, W).
    params = build_upconv_params(w_oihw, bias, H, W)
    return _upconv_apply(x_nchw, *params)


# ----------------------------------------------------------------------------
# Plain-JAX reference
# ----------------------------------------------------------------------------
def upconv_reference(x_nchw, w_oihw, bias):
    """align_corners=True bilinear x2 + 3x3 SAME conv, straight JAX."""
    B, C, H, W = x_nchw.shape
    OC = w_oihw.shape[0]
    H2, W2 = 2 * H, 2 * W
    x_nhwc = jnp.transpose(x_nchw, (0, 2, 3, 1)).astype(jnp.float32)
    rmat = jnp.asarray(_interp_matrix_np(H, H2))
    cmat = jnp.asarray(_interp_matrix_np(W, W2))
    up = jnp.einsum('oh,bhwc->bowc', rmat, x_nhwc)
    up = jnp.einsum('pw,bowc->bopc', cmat, up)
    w_hwio = jnp.transpose(w_oihw, (2, 3, 1, 0)).astype(jnp.float32)
    y = lax.conv_general_dilated(
        up, w_hwio, window_strides=(1, 1), padding='SAME',
        dimension_numbers=('NHWC', 'HWIO', 'NHWC'))
    y = y + bias.reshape(1, 1, 1, OC)
    return jnp.transpose(y, (0, 3, 1, 2))


if __name__ == "__main__":
    # B=4 exercises batching (Bt=2 images per grid step) while keeping 2
    # parallel grid steps (both v7x TensorCores busy).
    B, INC, OUTC, H, W = 4, 4, 8, 16, 16
    key = jax.random.PRNGKey(0)
    kx, kw, kb = jax.random.split(key, 3)

    x = jax.random.normal(kx, (B, INC, H, W), dtype=jnp.float32)
    # deterministic synthetic params (nn.Conv2d(inc, outc, 3) shapes)
    w = 0.1 * jax.random.normal(kw, (OUTC, INC, 3, 3), dtype=jnp.float32)
    b = 0.1 * jax.random.normal(kb, (OUTC,), dtype=jnp.float32)

    out = upconv_pallas(x, w, b)
    out = jax.block_until_ready(out)

    ref = upconv_reference(x, w, b)
    assert out.shape == (B, OUTC, 2 * H, 2 * W), out.shape
    err = float(jnp.max(jnp.abs(out - ref)))
    assert jnp.allclose(out, ref, atol=1e-4, rtol=1e-4), err

    print("KERNEL_OK")
</pallas_src>

<mosaic_0001>
module attributes {stable_mosaic.version = 11 : i64} {
  func.func @_upconv_kernel(%arg0: i32, %arg1: memref<2x16x64xf32, #tpu.memory_space<vmem>>, %arg2: memref<64x128xf32, #tpu.memory_space<vmem>>, %arg3: memref<96x16xf32, #tpu.memory_space<vmem>>, %arg4: memref<384x256xf32, #tpu.memory_space<vmem>>, %arg5: memref<1x256xf32, #tpu.memory_space<vmem>>, %arg6: memref<2x32x256xf32, #tpu.memory_space<vmem>>, %arg7: memref<64x384xf32, #tpu.memory_space<vmem>>) attributes {dimension_semantics = [#tpu.dimension_semantics<parallel>], iteration_bounds = array<i64: 2>, scalar_prefetch = 0 : i64, scratch_operands = 1 : i64, tpu.core_type = #tpu.core_type<tc>, window_params = [{transform_indices = @transform_0, window_bounds = array<i64: 2, 16, 64>}, {pipeline_mode = #tpu.pipeline_mode<synchronous>, transform_indices = @transform_1, window_bounds = array<i64: 64, 128>}, {pipeline_mode = #tpu.pipeline_mode<synchronous>, transform_indices = @transform_2, window_bounds = array<i64: 96, 16>}, {pipeline_mode = #tpu.pipeline_mode<synchronous>, transform_indices = @transform_3, window_bounds = array<i64: 384, 256>}, {pipeline_mode = #tpu.pipeline_mode<synchronous>, transform_indices = @transform_4, window_bounds = array<i64: 1, 256>}, {transform_indices = @transform_5, window_bounds = array<i64: 2, 32, 256>}]} {
    %c0 = arith.constant 0 : index
    %c0_0 = arith.constant 0 : index
    %c0_1 = arith.constant 0 : index
    %0 = vector.load %arg1[%c0, %c0_0, %c0_1] : memref<2x16x64xf32, #tpu.memory_space<vmem>>, vector<2x16x64xf32>
    %1 = vector.shape_cast %0 : vector<2x16x64xf32> to vector<32x64xf32>
    %c0_2 = arith.constant 0 : index
    %c0_3 = arith.constant 0 : index
    %2 = vector.load %arg2[%c0_2, %c0_3] : memref<64x128xf32, #tpu.memory_space<vmem>>, vector<64x128xf32>
    %cst = arith.constant dense<0.000000e+00> : vector<32x128xf32>
    %3 = tpu.matmul %1, %2, %cst {dimension_numbers = #tpu.dot_dimension_numbers<[1], [0], [0], [1], [0, 0, 1, 1], [], []>} : vector<32x64xf32>, vector<64x128xf32>, vector<32x128xf32> -> vector<32x128xf32>
    %c0_4 = arith.constant 0 : index
    %c0_5 = arith.constant 0 : index
    %4 = vector.load %arg3[%c0_4, %c0_5] : memref<96x16xf32, #tpu.memory_space<vmem>>, vector<96x16xf32>
    %5 = vector.extract_strided_slice %3 {offsets = [0, 0], sizes = [16, 128], strides = [1, 1]} : vector<32x128xf32> to vector<16x128xf32>
    %cst_6 = arith.constant dense<0.000000e+00> : vector<96x128xf32>
    %6 = tpu.matmul %4, %5, %cst_6 {dimension_numbers = #tpu.dot_dimension_numbers<[1], [0], [0], [1], [0, 0, 1, 1], [], []>} : vector<96x16xf32>, vector<16x128xf32>, vector<96x128xf32> -> vector<96x128xf32>
    %7 = vector.extract_strided_slice %6 {offsets = [0, 0], sizes = [32, 128], strides = [1, 1]} : vector<96x128xf32> to vector<32x128xf32>
    %c0_7 = arith.constant 0 : index
    %c0_8 = arith.constant 0 : index
    %8 = vector.load %arg7[%c0_7, %c0_8] : memref<64x384xf32, #tpu.memory_space<vmem>>, vector<32x128xf32>
    tpu.vector_store %arg7[%c0_7, %c0_8], %7 {strides = array<i32>} : memref<64x384xf32, #tpu.memory_space<vmem>>, vector<32x128xf32>,
    %9 = vector.extract_strided_slice %6 {offsets = [32, 0], sizes = [32, 128], strides = [1, 1]} : vector<96x128xf32> to vector<32x128xf32>
    %c0_9 = arith.constant 0 : index
    %c128 = arith.constant 128 : index
    %10 = vector.load %arg7[%c0_9, %c128] : memref<64x384xf32, #tpu.memory_space<vmem>>, vector<32x128xf32>
    tpu.vector_store %arg7[%c0_9, %c128], %9 {strides = array<i32>} : memref<64x384xf32, #tpu.memory_space<vmem>>, vector<32x128xf32>,
    %11 = vector.extract_strided_slice %6 {offsets = [64, 0], sizes = [32, 128], strides = [1, 1]} : vector<96x128xf32> to vector<32x128xf32>
    %c0_10 = arith.constant 0 : index
    %c256 = arith.constant 256 : index
    %12 = vector.load %arg7[%c0_10, %c256] : memref<64x384xf32, #tpu.memory_space<vmem>>, vector<32x128xf32>
    tpu.vector_store %arg7[%c0_10, %c256], %11 {strides = array<i32>} : memref<64x384xf32, #tpu.memory_space<vmem>>, vector<32x128xf32>,
    %13 = vector.extract_strided_slice %3 {offsets = [16, 0], sizes = [16, 128], strides = [1, 1]} : vector<32x128xf32> to vector<16x128xf32>
    %cst_11 = arith.constant dense<0.000000e+00> : vector<96x128xf32>
    %14 = tpu.matmul %4, %13, %cst_11 {dimension_numbers = #tpu.dot_dimension_numbers<[1], [0], [0], [1], [0, 0, 1, 1], [], []>} : vector<96x16xf32>, vector<16x128xf32>, vector<96x128xf32> -> vector<96x128xf32>
    %15 = vector.extract_strided_slice %14 {offsets = [0, 0], sizes = [32, 128], strides = [1, 1]} : vector<96x128xf32> to vector<32x128xf32>
    %c32 = arith.constant 32 : index
    %c0_12 = arith.constant 0 : index
    %16 = vector.load %arg7[%c32, %c0_12] : memref<64x384xf32, #tpu.memory_space<vmem>>, vector<32x128xf32>
    tpu.vector_store %arg7[%c32, %c0_12], %15 {strides = array<i32>} : memref<64x384xf32, #tpu.memory_space<vmem>>, vector<32x128xf32>,
    %17 = vector.extract_strided_slice %14 {offsets = [32, 0], sizes = [32, 128], strides = [1, 1]} : vector<96x128xf32> to vector<32x128xf32>
    %c32_13 = arith.constant 32 : index
    %c128_14 = arith.constant 128 : index
    %18 = vector.load %arg7[%c32_13, %c128_14] : memref<64x384xf32, #tpu.memory_space<vmem>>, vector<32x128xf32>
    tpu.vector_store %arg7[%c32_13, %c128_14], %17 {strides = array<i32>} : memref<64x384xf32, #tpu.memory_space<vmem>>, vector<32x128xf32>,
    %19 = vector.extract_strided_slice %14 {offsets = [64, 0], sizes = [32, 128], strides = [1, 1]} : vector<96x128xf32> to vector<32x128xf32>
    %c32_15 = arith.constant 32 : index
    %c256_16 = arith.constant 256 : index
    %20 = vector.load %arg7[%c32_15, %c256_16] : memref<64x384xf32, #tpu.memory_space<vmem>>, vector<32x128xf32>
    tpu.vector_store %arg7[%c32_15, %c256_16], %19 {strides = array<i32>} : memref<64x384xf32, #tpu.memory_space<vmem>>, vector<32x128xf32>,
    %c0_17 = arith.constant 0 : index
    %c0_18 = arith.constant 0 : index
    %21 = vector.load %arg7[%c0_17, %c0_18] : memref<64x384xf32, #tpu.memory_space<vmem>>, vector<64x384xf32>
    %c0_19 = arith.constant 0 : index
    %c0_20 = arith.constant 0 : index
    %22 = vector.load %arg4[%c0_19, %c0_20] : memref<384x256xf32, #tpu.memory_space<vmem>>, vector<384x256xf32>
    %cst_21 = arith.constant dense<0.000000e+00> : vector<64x256xf32>
    %23 = tpu.matmul %21, %22, %cst_21 {dimension_numbers = #tpu.dot_dimension_numbers<[1], [0], [0], [1], [0, 0, 1, 1], [], []>} : vector<64x384xf32>, vector<384x256xf32>, vector<64x256xf32> -> vector<64x256xf32>
    %c0_22 = arith.constant 0 : index
    %c0_23 = arith.constant 0 : index
    %24 = vector.load %arg5[%c0_22, %c0_23] : memref<1x256xf32, #tpu.memory_space<vmem>>, vector<1x256xf32>
    %25 = vector.broadcast %24 : vector<1x256xf32> to vector<64x256xf32>
    %26 = arith.addf %23, %25 : vector<64x256xf32>
    %27 = vector.shape_cast %26 : vector<64x256xf32> to vector<2x32x256xf32>
    %c0_24 = arith.constant 0 : index
    %c0_25 = arith.constant 0 : index
    %c0_26 = arith.constant 0 : index
    %28 = vector.load %arg6[%c0_24, %c0_25, %c0_26] : memref<2x32x256xf32, #tpu.memory_space<vmem>>, vector<2x32x256xf32>
    tpu.vector_store %arg6[%c0_24, %c0_25, %c0_26], %27 {strides = array<i32>} : memref<2x32x256xf32, #tpu.memory_space<vmem>>, vector<2x32x256xf32>,
    return
  }
  func.func @transform_0(%arg0: i32) -> (i32, i32, i32) {
    %c0_i32 = arith.constant 0 : i32
    %c0_i32_0 = arith.constant 0 : i32
    %c0_i32_1 = arith.constant 0 : i32
    return %arg0, %c0_i32, %c0_i32_0 : i32, i32, i32
  }
  func.func @transform_1(%arg0: i32) -> (i32, i32) {
    %c0_i32 = arith.constant 0 : i32
    %c0_i32_0 = arith.constant 0 : i32
    %c0_i32_1 = arith.constant 0 : i32
    return %c0_i32, %c0_i32_0 : i32, i32
  }
  func.func @transform_2(%arg0: i32) -> (i32, i32) {
    %c0_i32 = arith.constant 0 : i32
    %c0_i32_0 = arith.constant 0 : i32
    %c0_i32_1 = arith.constant 0 : i32
    return %c0_i32, %c0_i32_0 : i32, i32
  }
  func.func @transform_3(%arg0: i32) -> (i32, i32) {
    %c0_i32 = arith.constant 0 : i32
    %c0_i32_0 = arith.constant 0 : i32
    %c0_i32_1 = arith.constant 0 : i32
    return %c0_i32, %c0_i32_0 : i32, i32
  }
  func.func @transform_4(%arg0: i32) -> (i32, i32) {
    %c0_i32 = arith.constant 0 : i32
    %c0_i32_0 = arith.constant 0 : i32
    %c0_i32_1 = arith.constant 0 : i32
    return %c0_i32, %c0_i32_0 : i32, i32
  }
  func.func @transform_5(%arg0: i32) -> (i32, i32, i32) {
    %c0_i32 = arith.constant 0 : i32
    %c0_i32_0 = arith.constant 0 : i32
    %c0_i32_1 = arith.constant 0 : i32
    return %arg0, %c0_i32, %c0_i32_0 : i32, i32, i32
  }
}

</mosaic_0001>

<llo_original>
// kernel: _upconv_apply.1
$region0: #{_upconv_apply.1}
  #allocation0 [shape = 'u32[]', space=smem, size = 0x4, offset = 0x4, fixed_abs, tag = 'smem constant byte address 0x4 - core index']
  #allocation1 [shape = 'u32[144,128]{1,0:T(1,128)}', space=vmem, size = 0x12000, scoped, tag = 'internal scratch']
  #allocation2 [shape = 'f32[64,384]{1,0:T(8,128)}', space=vmem, size = 0x18000, scoped, tag = 'scratch operand']
  %s0 = inlined_call_operand.vmem [shape: f32[4,16,64], index: 0, kind: input, shape index: {}]
  %s1 = inlined_call_operand.vmem [shape: f32[64,128], index: 1, kind: input, shape index: {}]
  %s2 = inlined_call_operand.vmem [shape: f32[96,16], index: 2, kind: input, shape index: {}]
  %s3 = inlined_call_operand.vmem [shape: f32[384,256], index: 3, kind: input, shape index: {}]
  %s4 = inlined_call_operand.vmem [shape: f32[1,256], index: 4, kind: input, shape index: {}]
  %s5 = inlined_call_operand.vmem [shape: f32[4,32,256], index: 5, kind: output, shape index: {}]
  %s6 = sld [smem:[#allocation0]]
  $region53: #{_upconv_apply.1} parent=0
    _
  %s8 = ssub.s32 1, %s6
  %s9 = scalar_select 0, %s8, %s6
  loop: start=0, step=1, limit=4
  $region2: #{_upconv_apply.1} parent=0 // loop_pre_header
    _
  $region3: #{_upconv_apply.1} parent=0 // loop_header
    %s11 = sphi 0, %s15
    %p12 = scmp.ge.s32.totalorder %s11, 4
    %s21 = sphi 0, %s23
    %s24 = sphi 0, %s21
    %s25 = sphi 0, %s24
    %s41 = sphi 0, %s25
    %s45 = sphi 0, %s45
    %s47 = sphi 0, %s45
    %s48 = sphi 0, %s47
    %s62 = sphi 0, %s48
    %s66 = sphi 0, %s66
    %s68 = sphi 0, %s66
    %s69 = sphi 0, %s68
    %s83 = sphi 0, %s69
    %s87 = sphi 0, %s87
    %s89 = sphi 0, %s87
    %s90 = sphi 0, %s89
    %s104 = sphi 0, %s90
    %s108 = sphi 0, %s108
    %s110 = sphi 0, %s108
    %s111 = sphi 0, %s110
    %s125 = sphi 0, %s111
    %s131 = sphi 0, %s133
    %s134 = sphi 0, %s131
    %s135 = sphi 0, %s134
    %s151 = sphi 0, %s135
  $region4: #{_upconv_apply.1} parent=0 // loop_header_branch
    %14 = sbr.rel (%p12) target = $region8
  $region5: #{_upconv_apply.1} parent=0 // loop_body
    %s16 = ssub.s32 %s11, 1
    %s17 = ssub.s32 %s11, 2
    %s18 = sadd.s32 %s11, 1
    %s19 = ssub.s32 %s11, %s18
    %p20 = scmp.eq.s32.totalorder %s19, 0
    %s22 = sadd.s32 %s21, 1
    %s23 = scalar_select %p20, %s21, %s22
    %p26 = pneg %p20
    %p27 = scmp.eq.s32.totalorder %s11, 1
    %p28 = por %p26, %p27
    %p29 = scmp.ne.s32.totalorder %s21, %s24
    %p30 = scmp.eq.s32.totalorder %s11, 0
    %p31 = por %p29, %p30
    %p32 = scmp.ne.s32.totalorder %s21, %s24
    %p33 = scmp.eq.s32.totalorder %s16, 1
    %p34 = por %p32, %p33
    %p35 = scmp.ne.s32.totalorder %s24, %s25
    %p36 = scmp.eq.s32.totalorder %s16, 0
    %p37 = por %p35, %p36
    %p38 = scmp.ne.s32.totalorder %s24, %s25
    %p39 = scmp.eq.s32.totalorder %s17, 1
    %p40 = por %p38, %p39
    %p42 = scmp.ne.s32.totalorder %s25, %s41
    %p43 = scmp.eq.s32.totalorder %s17, 0
    %p44 = por %p42, %p43
    %s46 = sadd.s32 %s45, 1
    %p49 = scmp.eq.s32.totalorder %s11, 1
    %p50 = scmp.ne.s32.totalorder %s45, %s47
    %p51 = scmp.eq.s32.totalorder %s11, 0
    %p52 = por %p50, %p51
    %p53 = scmp.ne.s32.totalorder %s45, %s47
    %p54 = scmp.eq.s32.totalorder %s16, 1
    %p55 = por %p53, %p54
    %p56 = scmp.ne.s32.totalorder %s47, %s48
    %p57 = scmp.eq.s32.totalorder %s16, 0
    %p58 = por %p56, %p57
    %p59 = scmp.ne.s32.totalorder %s47, %s48
    %p60 = scmp.eq.s32.totalorder %s17, 1
    %p61 = por %p59, %p60
    %p63 = scmp.ne.s32.totalorder %s48, %s62
    %p64 = scmp.eq.s32.totalorder %s17, 0
    %p65 = por %p63, %p64
    %s67 = sadd.s32 %s66, 1
    %p70 = scmp.eq.s32.totalorder %s11, 1
    %p71 = scmp.ne.s32.totalorder %s66, %s68
    %p72 = scmp.eq.s32.totalorder %s11, 0
    %p73 = por %p71, %p72
    %p74 = scmp.ne.s32.totalorder %s66, %s68
    %p75 = scmp.eq.s32.totalorder %s16, 1
    %p76 = por %p74, %p75
    %p77 = scmp.ne.s32.totalorder %s68, %s69
    %p78 = scmp.eq.s32.totalorder %s16, 0
    %p79 = por %p77, %p78
    %p80 = scmp.ne.s32.totalorder %s68, %s69
    %p81 = scmp.eq.s32.totalorder %s17, 1
    %p82 = por %p80, %p81
    %p84 = scmp.ne.s32.totalorder %s69, %s83
    %p85 = scmp.eq.s32.totalorder %s17, 0
    %p86 = por %p84, %p85
    %s88 = sadd.s32 %s87, 1
    %p91 = scmp.eq.s32.totalorder %s11, 1
    %p92 = scmp.ne.s32.totalorder %s87, %s89
    %p93 = scmp.eq.s32.totalorder %s11, 0
    %p94 = por %p92, %p93
    %p95 = scmp.ne.s32.totalorder %s87, %s89
    %p96 = scmp.eq.s32.totalorder %s16, 1
    %p97 = por %p95, %p96
    %p98 = scmp.ne.s32.totalorder %s89, %s90
    %p99 = scmp.eq.s32.totalorder %s16, 0
    %p100 = por %p98, %p99
    %p101 = scmp.ne.s32.totalorder %s89, %s90
    %p102 = scmp.eq.s32.totalorder %s17, 1
    %p103 = por %p101, %p102
    %p105 = scmp.ne.s32.totalorder %s90, %s104
    %p106 = scmp.eq.s32.totalorder %s17, 0
    %p107 = por %p105, %p106
    %s109 = sadd.s32 %s108, 1
    %p112 = scmp.eq.s32.totalorder %s11, 1
    %p113 = scmp.ne.s32.totalorder %s108, %s110
    %p114 = scmp.eq.s32.totalorder %s11, 0
    %p115 = por %p113, %p114
    %p116 = scmp.ne.s32.totalorder %s108, %s110
    %p117 = scmp.eq.s32.totalorder %s16, 1
    %p118 = por %p116, %p117
    %p119 = scmp.ne.s32.totalorder %s110, %s111
    %p120 = scmp.eq.s32.totalorder %s16, 0
    %p121 = por %p119, %p120
    %p122 = scmp.ne.s32.totalorder %s110, %s111
    %p123 = scmp.eq.s32.totalorder %s17, 1
    %p124 = por %p122, %p123
    %p126 = scmp.ne.s32.totalorder %s111, %s125
    %p127 = scmp.eq.s32.totalorder %s17, 0
    %p128 = por %p126, %p127
    %s129 = ssub.s32 %s11, %s18
    %p130 = scmp.eq.s32.totalorder %s129, 0
    %s132 = sadd.s32 %s131, 1
    %s133 = scalar_select %p130, %s131, %s132
    %p136 = pneg %p130
    %p137 = scmp.eq.s32.totalorder %s11, 1
    %p138 = por %p136, %p137
    %p139 = scmp.ne.s32.totalorder %s131, %s134
    %p140 = scmp.eq.s32.totalorder %s11, 0
    %p141 = por %p139, %p140
    %p142 = scmp.ne.s32.totalorder %s131, %s134
    %p143 = scmp.eq.s32.totalorder %s16, 1
    %p144 = por %p142, %p143
    %p145 = scmp.ne.s32.totalorder %s134, %s135
    %p146 = scmp.eq.s32.totalorder %s16, 0
    %p147 = por %p145, %p146
    %p148 = scmp.ne.s32.totalorder %s134, %s135
    %p149 = scmp.eq.s32.totalorder %s17, 1
    %p150 = por %p148, %p149
    %p152 = scmp.ne.s32.totalorder %s135, %s151
    %p153 = scmp.eq.s32.totalorder %s17, 0
    %p154 = por %p152, %p153
    %p155 = scmp.le.s32.totalorder 1, %s11
    %p156 = scmp.lt.s32.totalorder %s11, 3
    %p157 = pnand %p155, %p156
    %p158 = pneg %p157
    // Predicated region
    $region9: #{_upconv_apply.1} parent=5 // pred_check
      _
    $region10: #{_upconv_apply.1} parent=5 // pred_check_branch
      %160 = sbr.rel (%p157) target = $region12
    $region11: #{_upconv_apply.1} parent=5 // pred_region
      %s161 = ssub.s32 %s11, 1
      // Predicated region
      $region13: #{_upconv_apply.1} parent=11 // pred_check
        %p162 = pneg %p58
      $region14: #{_upconv_apply.1} parent=11 // pred_check_branch
        %164 = sbr.rel (%p162) target = $region16
      $region15: #{_upconv_apply.1} parent=11 // pred_region
        _
      $region16: #{_upconv_apply.1} parent=11 // pred_fallthru
        _
      // Predicated region
      $region17: #{_upconv_apply.1} parent=11 // pred_check
        %p165 = pneg %p79
      $region18: #{_upconv_apply.1} parent=11 // pred_check_branch
        %167 = sbr.rel (%p165) target = $region20
      $region19: #{_upconv_apply.1} parent=11 // pred_region
        _
      $region20: #{_upconv_apply.1} parent=11 // pred_fallthru
        _
      // Predicated region
      $region21: #{_upconv_apply.1} parent=11 // pred_check
        %p168 = pneg %p100
      $region22: #{_upconv_apply.1} parent=11 // pred_check_branch
        %170 = sbr.rel (%p168) target = $region24
      $region23: #{_upconv_apply.1} parent=11 // pred_region
        _
      $region24: #{_upconv_apply.1} parent=11 // pred_fallthru
        _
      // Predicated region
      $region25: #{_upconv_apply.1} parent=11 // pred_check
        %p171 = pneg %p121
      $region26: #{_upconv_apply.1} parent=11 // pred_check_branch
        %173 = sbr.rel (%p171) target = $region28
      $region27: #{_upconv_apply.1} parent=11 // pred_region
        _
      $region28: #{_upconv_apply.1} parent=11 // pred_fallthru
        _
    $region12: #{_upconv_apply.1} parent=5 // pred_fallthru
      _
    %p174 = scmp.lt.s32.totalorder %s11, 2
    // Predicated region
    $region29: #{_upconv_apply.1} parent=5 // pred_check
      %p175 = pneg %p174
    $region30: #{_upconv_apply.1} parent=5 // pred_check_branch
      %177 = sbr.rel (%p175) target = $region32
    $region31: #{_upconv_apply.1} parent=5 // pred_region
      // Predicated region
      $region33: #{_upconv_apply.1} parent=31 // pred_check
        %p178 = pneg %p31
      $region34: #{_upconv_apply.1} parent=31 // pred_check_branch
        %180 = sbr.rel (%p178) target = $region36
      $region35: #{_upconv_apply.1} parent=31 // pred_region
        %s181 = smul.u32 2, %s11
        %p182 = scmp.lt.s32.totalorder %s181, 3
        %s183 = scalar_select %p182, %s181, 3
        %s184 = smul.addr %s183, 2
        %s185 = smul.addr %s184, 8
        %s186 = scalar_lea.vmem %s0, %s185
        %s187 = smul.u32 2, %s11
      $region36: #{_upconv_apply.1} parent=31 // pred_fallthru
        _
    $region32: #{_upconv_apply.1} parent=5 // pred_fallthru
      _
    %p188 = scmp.le.s32.totalorder 1, %s11
    %p189 = scmp.lt.s32.totalorder %s11, 3
    %p190 = pnand %p188, %p189
    %p191 = pneg %p190
    // Predicated region
    $region37: #{_upconv_apply.1} parent=5 // pred_check
      _
    $region38: #{_upconv_apply.1} parent=5 // pred_check_branch
      %193 = sbr.rel (%p190) target = $region40
    $region39: #{_upconv_apply.1} parent=5 // pred_region
      %s194 = ssub.s32 %s11, 1
      %s195 = smul.u32 2, %s16
      %p196 = scmp.lt.s32.totalorder %s195, 3
      %s197 = scalar_select %p196, %s195, 3
      %s198 = smul.addr %s197, 2
      %s199 = smul.addr %s198, 8
      %s200 = scalar_lea.vmem %s0, %s199
      %p201 = pneg %p37
      %p202 = pneg %p34
      %p203 = pneg %p58
      %p204 = pneg %p55
      %p205 = pneg %p79
      %p206 = pneg %p76
      %p207 = pneg %p100
      %p208 = pneg %p97
      %p209 = pneg %p121
      %p210 = pneg %p118
      %p211 = pneg %p147
      %p212 = pneg %p144
      %s213 = smul.u32 2, %s16
      %p214 = scmp.lt.s32.totalorder %s213, 3
      %s215 = scalar_select %p214, %s213, 3
      %s216 = smul.addr %s215, 8
      %s217 = smul.addr %s216, 8
      %s218 = scalar_lea.vmem %s5, %s217
      %s219 = smul.u32 2, %s16
      %p220 = scmp.lt.s32.totalorder %s219, 3
      %s221 = scalar_select %p220, %s219, 3
      %s222 = smul.addr %s221, 2
      %s223 = smul.addr %s222, 8
      %s224 = scalar_lea.vmem %s0, %s223
      %s225 = smul.u32 2, %s16
      %s226 = smul.u32 2, %s16
      %p227 = scmp.lt.s32.totalorder %s226, 3
      %s228 = scalar_select %p227, %s226, 3
      %s229 = smul.addr %s228, 8
      %s230 = smul.addr %s229, 8
      %s231 = scalar_lea.vmem %s5, %s230
      %s232 = smul.u32 2, %s16
      %v233 = vld [vmem:[%s224] sm:$0xff]
      %v234 = vld [vmem:[%s224 + $0x8] sm:$0xff]
      %v235 = vld [vmem:[%s224 + $0x10] sm:$0xff]
      %v236 = vld [vmem:[%s224 + $0x18] sm:$0xff]
      %v237 = vld [vmem:[%s1] sm:$0xff]
      %v238 = vld [vmem:[%s1 + $0x8] sm:$0xff]
      %v239 = vld [vmem:[%s1 + $0x10] sm:$0xff]
      %v240 = vld [vmem:[%s1 + $0x18] sm:$0xff]
      %v241 = vld [vmem:[%s1 + $0x20] sm:$0xff]
      %v242 = vld [vmem:[%s1 + $0x28] sm:$0xff]
      %v243 = vld [vmem:[%s1 + $0x30] sm:$0xff]
      %v244 = vld [vmem:[%s1 + $0x38] sm:$0xff]
      %vm245 = vcmask 523264
      %v247 = vsel %vm245, %v233, 0
      %v250 = vsel %vm245, %v234, 0
      %v253 = vsel %vm245, %v235, 0
      %v256 = vsel %vm245, %v236, 0
      %258 = vmatprep.subr.mxu0 0.0
      %259 = vmatpush1.msra.mxu0 %v237
      %260 = vmatprep.subr.mxu0 0.0
      %261 = vmatpush1.msra.mxu0 %v238
      %262 = vmatprep.subr.mxu0 0.0
      %263 = vmatpush1.msra.mxu0 %v239
      %264 = vmatprep.subr.mxu0 0.0
      %265 = vmatpush1.msra.mxu0 %v240
      %266 = vmatprep.subr.mxu0 0.0
      %267 = vmatpush1.msra.mxu0 %v241
      %268 = vmatprep.subr.mxu0 0.0
      %269 = vmatpush1.msra.mxu0 %v242
      %270 = vmatprep.subr.mxu0 0.0
      %271 = vmatpush1.msra.mxu0 %v243
      %272 = vmatprep.subr.mxu0 0.0
      %273 = vmatpush1.msra.mxu0 %v244
      %274 = vmatprep.subr.mxu0 0.0
      %275 = vmatpush1.msra.mxu0 0.0
      %276 = vmatprep.subr.mxu0 0.0
      %277 = vmatpush1.msra.mxu0 0.0
      %278 = vmatprep.subr.mxu0 0.0
      %279 = vmatpush1.msra.mxu0 0.0
      %280 = vmatprep.subr.mxu0 0.0
      %281 = vmatpush1.msra.mxu0 0.0
      %282 = vmatprep.subr.mxu0 0.0
      %283 = vmatpush1.msra.mxu0 0.0
      %284 = vmatprep.subr.mxu0 0.0
      %285 = vmatpush1.msra.mxu0 0.0
      %286 = vmatprep.subr.mxu0 0.0
      %287 = vmatpush1.msra.mxu0 0.0
      %288 = vmatprep.subr.mxu0 0.0
      %289 = vmatpush1.msra.mxu0 0.0
      %290 = vmatprep.subr.mxu0 0.0
      %291 = vmatpush1.msra.mxu0 0.0
      %292 = vmatprep.subr.mxu0 0.0
      %293 = vmatpush1.msra.mxu0 0.0
      %294 = vmatprep.subr.mxu0 0.0
      %295 = vmatpush1.msra.mxu0 0.0
      %296 = vmatprep.subr.mxu0 0.0
      %297 = vmatpush1.msra.mxu0 0.0
      %298 = vmatprep.subr.mxu0 0.0
      %299 = vmatpush1.msra.mxu0 0.0
      %300 = vmatprep.subr.mxu0 0.0
      %301 = vmatpush1.msra.mxu0 0.0
      %302 = vmatprep.subr.mxu0 0.0
      %303 = vmatpush1.msra.mxu0 0.0
      %304 = vmatprep.subr.mxu0 0.0
      %305 = vmatpush1.msra.mxu0 0.0
      %306 = vmatprep.subr.mxu0 0.0
      %307 = vmatpush1.msra.mxu0 0.0
      %308 = vmatprep.subr.mxu0 0.0
      %309 = vmatpush1.msra.mxu0 0.0
      %310 = vmatprep.subr.mxu0 0.0
      %311 = vmatpush1.msra.mxu0 0.0
      %312 = vmatprep.subr.mxu0 0.0
      %313 = vmatpush1.msra.mxu0 0.0
      %314 = vmatprep.subr.mxu0 0.0
      %315 = vmatpush1.msra.mxu0 0.0
      %316 = vmatprep.subr.mxu0 0.0
      %317 = vmatpush1.msra.mxu0 0.0
      %318 = vmatprep.subr.mxu0 0.0
      %319 = vmatpush1.msra.mxu0 0.0
      %320 = vmatprep.subr.mxu0 0.0
      %321 = vmatpush1.msra.mxu0 0.0
      %322 = vmatprep.mubr.f32.mxu0 0.0
      %323 = vmatmul.mubr.f32.gmra.mrb[0].mxu0 %v247
      %v324 = vpop.f32.mrb[0].mxu0
      %v325 = vadd.f32 0.0, %v324
      %v326 = vpop.f32.mrb[0].mxu0
      %327 = vmatprep.mubr.f32.mxu0 0.0
      %328 = vmatmul.mubr.f32.gmra.mrb[0].mxu0 %v250
      %v329 = vpop.f32.mrb[0].mxu0
      %v330 = vadd.f32 0.0, %v329
      %v331 = vpop.f32.mrb[0].mxu0
      %332 = vmatprep.mubr.f32.mxu0 0.0
      %333 = vmatmul.mubr.f32.gmra.mrb[0].mxu0 %v253
      %v334 = vpop.f32.mrb[0].mxu0
      %v335 = vadd.f32 0.0, %v334
      %v336 = vpop.f32.mrb[0].mxu0
      %337 = vmatprep.mubr.f32.mxu0 0.0
      %338 = vmatmul.mubr.f32.gmra.mrb[0].mxu0 %v256
      %v339 = vpop.f32.mrb[0].mxu0
      %v340 = vadd.f32 0.0, %v339
      %v341 = vpop.f32.mrb[0].mxu0
      %342 = vdwg.mxu0
      %v343 = vld [vmem:[%s2] sm:$0xff]
      %v344 = vld [vmem:[%s2 + $0x8] sm:$0xff]
      %v345 = vld [vmem:[%s2 + $0x10] sm:$0xff]
      %v346 = vld [vmem:[%s2 + $0x18] sm:$0xff]
      %v347 = vld [vmem:[%s2 + $0x20] sm:$0xff]
      %v348 = vld [vmem:[%s2 + $0x28] sm:$0xff]
      %v349 = vld [vmem:[%s2 + $0x30] sm:$0xff]
      %v350 = vld [vmem:[%s2 + $0x38] sm:$0xff]
      %v351 = vld [vmem:[%s2 + $0x40] sm:$0xff]
      %v352 = vld [vmem:[%s2 + $0x48] sm:$0xff]
      %v353 = vld [vmem:[%s2 + $0x50] sm:$0xff]
      %v354 = vld [vmem:[%s2 + $0x58] sm:$0xff]
      %vm355 = vcmask 130048
      %v357 = vsel %vm355, %v343, 0
      %v360 = vsel %vm355, %v344, 0
      %v363 = vsel %vm355, %v345, 0
      %v366 = vsel %vm355, %v346, 0
      %v369 = vsel %vm355, %v347, 0
      %v372 = vsel %vm355, %v348, 0
      %v375 = vsel %vm355, %v349, 0
      %v378 = vsel %vm355, %v350, 0
      %v381 = vsel %vm355, %v351, 0
      %v384 = vsel %vm355, %v352, 0
      %v387 = vsel %vm355, %v353, 0
      %v390 = vsel %vm355, %v354, 0
      %392 = vmatprep.subr.mxu0 0.0
      %393 = vmatpush1.msra.mxu0 %v325
      %394 = vmatprep.subr.mxu0 0.0
      %395 = vmatpush1.msra.mxu0 %v330
      %396 = vmatprep.subr.mxu0 0.0
      %397 = vmatpush1.msra.mxu0 0.0
      %398 = vmatprep.subr.mxu0 0.0
      %399 = vmatpush1.msra.mxu0 0.0
      %400 = vmatprep.subr.mxu0 0.0
      %401 = vmatpush1.msra.mxu0 0.0
      %402 = vmatprep.subr.mxu0 0.0
      %403 = vmatpush1.msra.mxu0 0.0
      %404 = vmatprep.subr.mxu0 0.0
      %405 = vmatpush1.msra.mxu0 0.0
      %406 = vmatprep.subr.mxu0 0.0
      %407 = vmatpush1.msra.mxu0 0.0
      %408 = vmatprep.subr.mxu0 0.0
      %409 = vmatpush1.msra.mxu0 0.0
      %410 = vmatprep.subr.mxu0 0.0
      %411 = vmatpush1.msra.mxu0 0.0
      %412 = vmatprep.subr.mxu0 0.0
      %413 = vmatpush1.msra.mxu0 0.0
      %414 = vmatprep.subr.mxu0 0.0
      %415 = vmatpush1.msra.mxu0 0.0
      %416 = vmatprep.subr.mxu0 0.0
      %417 = vmatpush1.msra.mxu0 0.0
      %418 = vmatprep.subr.mxu0 0.0
      %419 = vmatpush1.msra.mxu0 0.0
      %420 = vmatprep.subr.mxu0 0.0
      %421 = vmatpush1.msra.mxu0 0.0
      %422 = vmatprep.subr.mxu0 0.0
      %423 = vmatpush1.msra.mxu0 0.0
      %424 = vmatprep.subr.mxu0 0.0
      %425 = vmatpush1.msra.mxu0 0.0
      %426 = vmatprep.subr.mxu0 0.0
      %427 = vmatpush1.msra.mxu0 0.0
      %428 = vmatprep.subr.mxu0 0.0
      %429 = vmatpush1.msra.mxu0 0.0
      %430 = vmatprep.subr.mxu0 0.0
      %431 = vmatpush1.msra.mxu0 0.0
      %432 = vmatprep.subr.mxu0 0.0
      %433 = vmatpush1.msra.mxu0 0.0
      %434 = vmatprep.subr.mxu0 0.0
      %435 = vmatpush1.msra.mxu0 0.0
      %436 = vmatprep.subr.mxu0 0.0
      %437 = vmatpush1.msra.mxu0 0.0
      %438 = vmatprep.subr.mxu0 0.0
      %439 = vmatpush1.msra.mxu0 0.0
      %440 = vmatprep.subr.mxu0 0.0
      %441 = vmatpush1.msra.mxu0 0.0
      %442 = vmatprep.subr.mxu0 0.0
      %443 = vmatpush1.msra.mxu0 0.0
      %444 = vmatprep.subr.mxu0 0.0
      %445 = vmatpush1.msra.mxu0 0.0
      %446 = vmatprep.subr.mxu0 0.0
      %447 = vmatpush1.msra.mxu0 0.0
      %448 = vmatprep.subr.mxu0 0.0
      %449 = vmatpush1.msra.mxu0 0.0
      %450 = vmatprep.subr.mxu0 0.0
      %451 = vmatpush1.msra.mxu0 0.0
      %452 = vmatprep.subr.mxu0 0.0
      %453 = vmatpush1.msra.mxu0 0.0
      %454 = vmatprep.subr.mxu0 0.0
      %455 = vmatpush1.msra.mxu0 0.0
      %456 = vmatprep.mubr.f32.mxu0 0.0
      %457 = vmatmul.mubr.f32.gmra.mrb[0].mxu0 %v357
      %v458 = vpop.f32.mrb[0].mxu0
      %v459 = vadd.f32 0.0, %v458
      %v460 = vpop.f32.mrb[0].mxu0
      %461 = vmatprep.mubr.f32.mxu0 0.0
      %462 = vmatmul.mubr.f32.gmra.mrb[0].mxu0 %v360
      %v463 = vpop.f32.mrb[0].mxu0
      %v464 = vadd.f32 0.0, %v463
      %v465 = vpop.f32.mrb[0].mxu0
      %466 = vmatprep.mubr.f32.mxu0 0.0
      %467 = vmatmul.mubr.f32.gmra.mrb[0].mxu0 %v363
      %v468 = vpop.f32.mrb[0].mxu0
      %v469 = vadd.f32 0.0, %v468
      %v470 = vpop.f32.mrb[0].mxu0
      %471 = vmatprep.mubr.f32.mxu0 0.0
      %472 = vmatmul.mubr.f32.gmra.mrb[0].mxu0 %v366
      %v473 = vpop.f32.mrb[0].mxu0
      %v474 = vadd.f32 0.0, %v473
      %v475 = vpop.f32.mrb[0].mxu0
      %476 = vmatprep.mubr.f32.mxu0 0.0
      %477 = vmatmul.mubr.f32.gmra.mrb[0].mxu0 %v369
      %v478 = vpop.f32.mrb[0].mxu0
      %v479 = vadd.f32 0.0, %v478
      %v480 = vpop.f32.mrb[0].mxu0
      %481 = vmatprep.mubr.f32.mxu0 0.0
      %482 = vmatmul.mubr.f32.gmra.mrb[0].mxu0 %v372
      %v483 = vpop.f32.mrb[0].mxu0
      %v484 = vadd.f32 0.0, %v483
      %v485 = vpop.f32.mrb[0].mxu0
      %486 = vmatprep.mubr.f32.mxu0 0.0
      %487 = vmatmul.mubr.f32.gmra.mrb[0].mxu0 %v375
      %v488 = vpop.f32.mrb[0].mxu0
      %v489 = vadd.f32 0.0, %v488
      %v490 = vpop.f32.mrb[0].mxu0
      %491 = vmatprep.mubr.f32.mxu0 0.0
      %492 = vmatmul.mubr.f32.gmra.mrb[0].mxu0 %v378
      %v493 = vpop.f32.mrb[0].mxu0
      %v494 = vadd.f32 0.0, %v493
      %v495 = vpop.f32.mrb[0].mxu0
      %496 = vmatprep.mubr.f32.mxu0 0.0
      %497 = vmatmul.mubr.f32.gmra.mrb[0].mxu0 %v381
      %v498 = vpop.f32.mrb[0].mxu0
      %v499 = vadd.f32 0.0, %v498
      %v500 = vpop.f32.mrb[0].mxu0
      %501 = vmatprep.mubr.f32.mxu0 0.0
      %502 = vmatmul.mubr.f32.gmra.mrb[0].mxu0 %v384
      %v503 = vpop.f32.mrb[0].mxu0
      %v504 = vadd.f32 0.0, %v503
      %v505 = vpop.f32.mrb[0].mxu0
      %506 = vmatprep.mubr.f32.mxu0 0.0
      %507 = vmatmul.mubr.f32.gmra.mrb[0].mxu0 %v387
      %v508 = vpop.f32.mrb[0].mxu0
      %v509 = vadd.f32 0.0, %v508
      %v510 = vpop.f32.mrb[0].mxu0
      %511 = vmatprep.mubr.f32.mxu0 0.0
      %512 = vmatmul.mubr.f32.gmra.mrb[0].mxu0 %v390
      %v513 = vpop.f32.mrb[0].mxu0
      %v514 = vadd.f32 0.0, %v513
      %v515 = vpop.f32.mrb[0].mxu0
      %516 = vdwg.mxu0
      %517 = vst [vmem:[#allocation2] sm:$0xff] %v459
      %518 = vst [vmem:[#allocation2 + $0x18] sm:$0xff] %v464
      %519 = vst [vmem:[#allocation2 + $0x30] sm:$0xff] %v469
      %520 = vst [vmem:[#allocation2 + $0x48] sm:$0xff] %v474
      %521 = vst [vmem:[#allocation2 + $0x8] sm:$0xff] %v479
      %522 = vst [vmem:[#allocation2 + $0x20] sm:$0xff] %v484
      %523 = vst [vmem:[#allocation2 + $0x38] sm:$0xff] %v489
      %524 = vst [vmem:[#allocation2 + $0x50] sm:$0xff] %v494
      %525 = vst [vmem:[#allocation2 + $0x10] sm:$0xff] %v499
      %526 = vst [vmem:[#allocation2 + $0x28] sm:$0xff] %v504
      %527 = vst [vmem:[#allocation2 + $0x40] sm:$0xff] %v509
      %528 = vst [vmem:[#allocation2 + $0x58] sm:$0xff] %v514
      %529 = vmatprep.subr.mxu0 0.0
      %530 = vmatpush1.msra.mxu0 %v335
      %531 = vmatprep.subr.mxu0 0.0
      %532 = vmatpush1.msra.mxu0 %v340
      %533 = vmatprep.subr.mxu0 0.0
      %534 = vmatpush1.msra.mxu0 0.0
      %535 = vmatprep.subr.mxu0 0.0
      %536 = vmatpush1.msra.mxu0 0.0
      %537 = vmatprep.subr.mxu0 0.0
      %538 = vmatpush1.msra.mxu0 0.0
      %539 = vmatprep.subr.mxu0 0.0
      %540 = vmatpush1.msra.mxu0 0.0
      %541 = vmatprep.subr.mxu0 0.0
      %542 = vmatpush1.msra.mxu0 0.0
      %543 = vmatprep.subr.mxu0 0.0
      %544 = vmatpush1.msra.mxu0 0.0
      %545 = vmatprep.subr.mxu0 0.0
      %546 = vmatpush1.msra.mxu0 0.0
      %547 = vmatprep.subr.mxu0 0.0
      %548 = vmatpush1.msra.mxu0 0.0
      %549 = vmatprep.subr.mxu0 0.0
      %550 = vmatpush1.msra.mxu0 0.0
      %551 = vmatprep.subr.mxu0 0.0
      %552 = vmatpush1.msra.mxu0 0.0
      %553 = vmatprep.subr.mxu0 0.0
      %554 = vmatpush1.msra.mxu0 0.0
      %555 = vmatprep.subr.mxu0 0.0
      %556 = vmatpush1.msra.mxu0 0.0
      %557 = vmatprep.subr.mxu0 0.0
      %558 = vmatpush1.msra.mxu0 0.0
      %559 = vmatprep.subr.mxu0 0.0
      %560 = vmatpush1.msra.mxu0 0.0
      %561 = vmatprep.subr.mxu0 0.0
      %562 = vmatpush1.msra.mxu0 0.0
      %563 = vmatprep.subr.mxu0 0.0
      %564 = vmatpush1.msra.mxu0 0.0
      %565 = vmatprep.subr.mxu0 0.0
      %566 = vmatpush1.msra.mxu0 0.0
      %567 = vmatprep.subr.mxu0 0.0
      %568 = vmatpush1.msra.mxu0 0.0
      %569 = vmatprep.subr.mxu0 0.0
      %570 = vmatpush1.msra.mxu0 0.0
      %571 = vmatprep.subr.mxu0 0.0
      %572 = vmatpush1.msra.mxu0 0.0
      %573 = vmatprep.subr.mxu0 0.0
      %574 = vmatpush1.msra.mxu0 0.0
      %575 = vmatprep.subr.mxu0 0.0
      %576 = vmatpush1.msra.mxu0 0.0
      %577 = vmatprep.subr.mxu0 0.0
      %578 = vmatpush1.msra.mxu0 0.0
      %579 = vmatprep.subr.mxu0 0.0
      %580 = vmatpush1.msra.mxu0 0.0
      %581 = vmatprep.subr.mxu0 0.0
      %582 = vmatpush1.msra.mxu0 0.0
      %583 = vmatprep.subr.mxu0 0.0
      %584 = vmatpush1.msra.mxu0 0.0
      %585 = vmatprep.subr.mxu0 0.0
      %586 = vmatpush1.msra.mxu0 0.0
      %587 = vmatprep.subr.mxu0 0.0
      %588 = vmatpush1.msra.mxu0 0.0
      %589 = vmatprep.subr.mxu0 0.0
      %590 = vmatpush1.msra.mxu0 0.0
      %591 = vmatprep.subr.mxu0 0.0
      %592 = vmatpush1.msra.mxu0 0.0
      %593 = vmatprep.mubr.f32.mxu0 0.0
      %594 = vmatmul.mubr.f32.gmra.mrb[0].mxu0 %v357
      %v595 = vpop.f32.mrb[0].mxu0
      %v596 = vadd.f32 0.0, %v595
      %v597 = vpop.f32.mrb[0].mxu0
      %598 = vmatprep.mubr.f32.mxu0 0.0
      %599 = vmatmul.mubr.f32.gmra.mrb[0].mxu0 %v360
      %v600 = vpop.f32.mrb[0].mxu0
      %v601 = vadd.f32 0.0, %v600
      %v602 = vpop.f32.mrb[0].mxu0
      %603 = vmatprep.mubr.f32.mxu0 0.0
      %604 = vmatmul.mubr.f32.gmra.mrb[0].mxu0 %v363
      %v605 = vpop.f32.mrb[0].mxu0
      %v606 = vadd.f32 0.0, %v605
      %v607 = vpop.f32.mrb[0].mxu0
      %608 = vmatprep.mubr.f32.mxu0 0.0
      %609 = vmatmul.mubr.f32.gmra.mrb[0].mxu0 %v366
      %v610 = vpop.f32.mrb[0].mxu0
      %v611 = vadd.f32 0.0, %v610
      %v612 = vpop.f32.mrb[0].mxu0
      %613 = vmatprep.mubr.f32.mxu0 0.0
      %614 = vmatmul.mubr.f32.gmra.mrb[0].mxu0 %v369
      %v615 = vpop.f32.mrb[0].mxu0
      %v616 = vadd.f32 0.0, %v615
      %v617 = vpop.f32.mrb[0].mxu0
      %618 = vmatprep.mubr.f32.mxu0 0.0
      %619 = vmatmul.mubr.f32.gmra.mrb[0].mxu0 %v372
      %v620 = vpop.f32.mrb[0].mxu0
      %v621 = vadd.f32 0.0, %v620
      %v622 = vpop.f32.mrb[0].mxu0
      %623 = vmatprep.mubr.f32.mxu0 0.0
      %624 = vmatmul.mubr.f32.gmra.mrb[0].mxu0 %v375
      %v625 = vpop.f32.mrb[0].mxu0
      %v626 = vadd.f32 0.0, %v625
      %v627 = vpop.f32.mrb[0].mxu0
      %628 = vmatprep.mubr.f32.mxu0 0.0
      %629 = vmatmul.mubr.f32.gmra.mrb[0].mxu0 %v378
      %v630 = vpop.f32.mrb[0].mxu0
      %v631 = vadd.f32 0.0, %v630
      %v632 = vpop.f32.mrb[0].mxu0
      %633 = vmatprep.mubr.f32.mxu0 0.0
      %634 = vmatmul.mubr.f32.gmra.mrb[0].mxu0 %v381
      %v635 = vpop.f32.mrb[0].mxu0
      %v636 = vadd.f32 0.0, %v635
      %v637 = vpop.f32.mrb[0].mxu0
      %638 = vmatprep.mubr.f32.mxu0 0.0
      %639 = vmatmul.mubr.f32.gmra.mrb[0].mxu0 %v384
      %v640 = vpop.f32.mrb[0].mxu0
      %v641 = vadd.f32 0.0, %v640
      %v642 = vpop.f32.mrb[0].mxu0
      %643 = vmatprep.mubr.f32.mxu0 0.0
      %644 = vmatmul.mubr.f32.gmra.mrb[0].mxu0 %v387
      %v645 = vpop.f32.mrb[0].mxu0
      %v646 = vadd.f32 0.0, %v645
      %v647 = vpop.f32.mrb[0].mxu0
      %648 = vmatprep.mubr.f32.mxu0 0.0
      %649 = vmatmul.mubr.f32.gmra.mrb[0].mxu0 %v390
      %v650 = vpop.f32.mrb[0].mxu0
      %v651 = vadd.f32 0.0, %v650
      %v652 = vpop.f32.mrb[0].mxu0
      %653 = vdwg.mxu0
      %654 = vst [vmem:[#allocation2 + $0x60] sm:$0xff] %v596
      %655 = vst [vmem:[#allocation2 + $0x78] sm:$0xff] %v601
      %656 = vst [vmem:[#allocation2 + $0x90] sm:$0xff] %v606
      %657 = vst [vmem:[#allocation2 + $0xa8] sm:$0xff] %v611
      %658 = vst [vmem:[#allocation2 + $0x68] sm:$0xff] %v616
      %659 = vst [vmem:[#allocation2 + $0x80] sm:$0xff] %v621
      %660 = vst [vmem:[#allocation2 + $0x98] sm:$0xff] %v626
      %661 = vst [vmem:[#allocation2 + $0xb0] sm:$0xff] %v631
      %662 = vst [vmem:[#allocation2 + $0x70] sm:$0xff] %v636
      %663 = vst [vmem:[#allocation2 + $0x88] sm:$0xff] %v641
      %664 = vst [vmem:[#allocation2 + $0xa0] sm:$0xff] %v646
      %665 = vst [vmem:[#allocation2 + $0xb8] sm:$0xff] %v651
      %v666 = vld [vmem:[#allocation2] sm:$0xff]
      %v667 = vld [vmem:[#allocation2 + $0x8] sm:$0xff]
      %v668 = vld [vmem:[#allocation2 + $0x10] sm:$0xff]
      %v669 = vld [vmem:[#allocation2 + $0x18] sm:$0xff]
      %v670 = vld [vmem:[#allocation2 + $0x20] sm:$0xff]
      %v671 = vld [vmem:[#allocation2 + $0x28] sm:$0xff]
      %v672 = vld [vmem:[#allocation2 + $0x30] sm:$0xff]
      %v673 = vld [vmem:[#allocation2 + $0x38] sm:$0xff]
      %v674 = vld [vmem:[#allocation2 + $0x40] sm:$0xff]
      %v675 = vld [vmem:[#allocation2 + $0x48] sm:$0xff]
      %v676 = vld [vmem:[#allocation2 + $0x50] sm:$0xff]
      %v677 = vld [vmem:[#allocation2 + $0x58] sm:$0xff]
      %v678 = vld [vmem:[#allocation2 + $0x60] sm:$0xff]
      %v679 = vld [vmem:[#allocation2 + $0x68] sm:$0xff]
      %v680 = vld [vmem:[#allocation2 + $0x70] sm:$0xff]
      %v681 = vld [vmem:[#allocation2 + $0x78] sm:$0xff]
      %v682 = vld [vmem:[#allocation2 + $0x80] sm:$0xff]
      %v683 = vld [vmem:[#allocation2 + $0x88] sm:$0xff]
      %v684 = vld [vmem:[#allocation2 + $0x90] sm:$0xff]
      %v685 = vld [vmem:[#allocation2 + $0x98] sm:$0xff]
      %v686 = vld [vmem:[#allocation2 + $0xa0] sm:$0xff]
      %v687 = vld [vmem:[#allocation2 + $0xa8] sm:$0xff]
      %v688 = vld [vmem:[#allocation2 + $0xb0] sm:$0xff]
      %v689 = vld [vmem:[#allocation2 + $0xb8] sm:$0xff]
      %v690 = vld [vmem:[%s3] sm:$0xff]
      %v691 = vld [vmem:[%s3 + $0x8] sm:$0xff]
      %v692 = vld [vmem:[%s3 + $0x10] sm:$0xff]
      %v693 = vld [vmem:[%s3 + $0x18] sm:$0xff]
      %v694 = vld [vmem:[%s3 + $0x20] sm:$0xff]
      %v695 = vld [vmem:[%s3 + $0x28] sm:$0xff]
      %v696 = vld [vmem:[%s3 + $0x30] sm:$0xff]
      %v697 = vld [vmem:[%s3 + $0x38] sm:$0xff]
      %v698 = vld [vmem:[%s3 + $0x40] sm:$0xff]
      %v699 = vld [vmem:[%s3 + $0x48] sm:$0xff]
      %v700 = vld [vmem:[%s3 + $0x50] sm:$0xff]
      %v701 = vld [vmem:[%s3 + $0x58] sm:$0xff]
      %v702 = vld [vmem:[%s3 + $0x60] sm:$0xff]
      %v703 = vld [vmem:[%s3 + $0x68] sm:$0xff]
      %v704 = vld [vmem:[%s3 + $0x70] sm:$0xff]
      %v705 = vld [vmem:[%s3 + $0x78] sm:$0xff]
      %v706 = vld [vmem:[%s3 + $0x80] sm:$0xff]
      %v707 = vld [vmem:[%s3 + $0x88] sm:$0xff]
      %v708 = vld [vmem:[%s3 + $0x90] sm:$0xff]
      %v709 = vld [vmem:[%s3 + $0x98] sm:$0xff]
      %v710 = vld [vmem:[%s3 + $0xa0] sm:$0xff]
      %v711 = vld [vmem:[%s3 + $0xa8] sm:$0xff]
      %v712 = vld [vmem:[%s3 + $0xb0] sm:$0xff]
      %v713 = vld [vmem:[%s3 + $0xb8] sm:$0xff]
      %v714 = vld [vmem:[%s3 + $0xc0] sm:$0xff]
      %v715 = vld [vmem:[%s3 + $0xc8] sm:$0xff]
      %v716 = vld [vmem:[%s3 + $0xd0] sm:$0xff]
      %v717 = vld [vmem:[%s3 + $0xd8] sm:$0xff]
      %v718 = vld [vmem:[%s3 + $0xe0] sm:$0xff]
      %v719 = vld [vmem:[%s3 + $0xe8] sm:$0xff]
      %v720 = vld [vmem:[%s3 + $0xf0] sm:$0xff]
      %v721 = vld [vmem:[%s3 + $0xf8] sm:$0xff]
      %v722 = vld [vmem:[%s3 + $0x100] sm:$0xff]
      %v723 = vld [vmem:[%s3 + $0x108] sm:$0xff]
      %v724 = vld [vmem:[%s3 + $0x110] sm:$0xff]
      %v725 = vld [vmem:[%s3 + $0x118] sm:$0xff]
      %v726 = vld [vmem:[%s3 + $0x120] sm:$0xff]
      %v727 = vld [vmem:[%s3 + $0x128] sm:$0xff]
      %v728 = vld [vmem:[%s3 + $0x130] sm:$0xff]
      %v729 = vld [vmem:[%s3 + $0x138] sm:$0xff]
      %v730 = vld [vmem:[%s3 + $0x140] sm:$0xff]
      %v731 = vld [vmem:[%s3 + $0x148] sm:$0xff]
      %v732 = vld [vmem:[%s3 + $0x150] sm:$0xff]
      %v733 = vld [vmem:[%s3 + $0x158] sm:$0xff]
      %v734 = vld [vmem:[%s3 + $0x160] sm:$0xff]
      %v735 = vld [vmem:[%s3 + $0x168] sm:$0xff]
      %v736 = vld [vmem:[%s3 + $0x170] sm:$0xff]
      %v737 = vld [vmem:[%s3 + $0x178] sm:$0xff]
      %v738 = vld [vmem:[%s3 + $0x180] sm:$0xff]
      %v739 = vld [vmem:[%s3 + $0x188] sm:$0xff]
      %v740 = vld [vmem:[%s3 + $0x190] sm:$0xff]
      %v741 = vld [vmem:[%s3 + $0x198] sm:$0xff]
      %v742 = vld [vmem:[%s3 + $0x1a0] sm:$0xff]
      %v743 = vld [vmem:[%s3 + $0x1a8] sm:$0xff]
      %v744 = vld [vmem:[%s3 + $0x1b0] sm:$0xff]
      %v745 = vld [vmem:[%s3 + $0x1b8] sm:$0xff]
      %v746 = vld [vmem:[%s3 + $0x1c0] sm:$0xff]
      %v747 = vld [vmem:[%s3 + $0x1c8] sm:$0xff]
      %v748 = vld [vmem:[%s3 + $0x1d0] sm:$0xff]
      %v749 = vld [vmem:[%s3 + $0x1d8] sm:$0xff]
      %v750 = vld [vmem:[%s3 + $0x1e0] sm:$0xff]
      %v751 = vld [vmem:[%s3 + $0x1e8] sm:$0xff]
      %v752 = vld [vmem:[%s3 + $0x1f0] sm:$0xff]
      %v753 = vld [vmem:[%s3 + $0x1f8] sm:$0xff]
      %v754 = vld [vmem:[%s3 + $0x200] sm:$0xff]
      %v755 = vld [vmem:[%s3 + $0x208] sm:$0xff]
      %v756 = vld [vmem:[%s3 + $0x210] sm:$0xff]
      %v757 = vld [vmem:[%s3 + $0x218] sm:$0xff]
      %v758 = vld [vmem:[%s3 + $0x220] sm:$0xff]
      %v759 = vld [vmem:[%s3 + $0x228] sm:$0xff]
      %v760 = vld [vmem:[%s3 + $0x230] sm:$0xff]
      %v761 = vld [vmem:[%s3 + $0x238] sm:$0xff]
      %v762 = vld [vmem:[%s3 + $0x240] sm:$0xff]
      %v763 = vld [vmem:[%s3 + $0x248] sm:$0xff]
      %v764 = vld [vmem:[%s3 + $0x250] sm:$0xff]
      %v765 = vld [vmem:[%s3 + $0x258] sm:$0xff]
      %v766 = vld [vmem:[%s3 + $0x260] sm:$0xff]
      %v767 = vld [vmem:[%s3 + $0x268] sm:$0xff]
      %v768 = vld [vmem:[%s3 + $0x270] sm:$0xff]
      %v769 = vld [vmem:[%s3 + $0x278] sm:$0xff]
      %v770 = vld [vmem:[%s3 + $0x280] sm:$0xff]
      %v771 = vld [vmem:[%s3 + $0x288] sm:$0xff]
      %v772 = vld [vmem:[%s3 + $0x290] sm:$0xff]
      %v773 = vld [vmem:[%s3 + $0x298] sm:$0xff]
      %v774 = vld [vmem:[%s3 + $0x2a0] sm:$0xff]
      %v775 = vld [vmem:[%s3 + $0x2a8] sm:$0xff]
      %v776 = vld [vmem:[%s3 + $0x2b0] sm:$0xff]
      %v777 = vld [vmem:[%s3 + $0x2b8] sm:$0xff]
      %v778 = vld [vmem:[%s3 + $0x2c0] sm:$0xff]
      %v779 = vld [vmem:[%s3 + $0x2c8] sm:$0xff]
      %v780 = vld [vmem:[%s3 + $0x2d0] sm:$0xff]
      %v781 = vld [vmem:[%s3 + $0x2d8] sm:$0xff]
      %v782 = vld [vmem:[%s3 + $0x2e0] sm:$0xff]
      %v783 = vld [vmem:[%s3 + $0x2e8] sm:$0xff]
      %v784 = vld [vmem:[%s3 + $0x2f0] sm:$0xff]
      %v785 = vld [vmem:[%s3 + $0x2f8] sm:$0xff]
      %v786 = vld [vmem:[%s4] sm:$0x3]
      %v788 = vlaneseq
      %v789 = vshrl.u32 %v788, 7
      %v790 = vsub.s32 0, %v789
      %v791 = vrot.slane %v786, %v790
      %v792 = vlaneseq
      %v793 = vshrl.u32 %v792, 7
      %v794 = vsub.s32 1, %v793
      %v795 = vrot.slane %v786, %v794
      %798 = vmatprep.subr.mxu0 %v691
      %799 = vmatpush1.msra.mxu0 %v690
      %800 = vmatprep.subr.mxu0 %v693
      %801 = vmatpush1.msra.mxu0 %v692
      %802 = vmatprep.subr.mxu0 %v695
      %803 = vmatpush1.msra.mxu0 %v694
      %804 = vmatprep.subr.mxu0 %v697
      %805 = vmatpush1.msra.mxu0 %v696
      %806 = vmatprep.subr.mxu0 %v699
      %807 = vmatpush1.msra.mxu0 %v698
      %808 = vmatprep.subr.mxu0 %v701
      %809 = vmatpush1.msra.mxu0 %v700
      %810 = vmatprep.subr.mxu0 %v703
      %811 = vmatpush1.msra.mxu0 %v702
      %812 = vmatprep.subr.mxu0 %v705
      %813 = vmatpush1.msra.mxu0 %v704
      %814 = vmatprep.subr.mxu0 %v707
      %815 = vmatpush1.msra.mxu0 %v706
      %816 = vmatprep.subr.mxu0 %v709
      %817 = vmatpush1.msra.mxu0 %v708
      %818 = vmatprep.subr.mxu0 %v711
      %819 = vmatpush1.msra.mxu0 %v710
      %820 = vmatprep.subr.mxu0 %v713
      %821 = vmatpush1.msra.mxu0 %v712
      %822 = vmatprep.subr.mxu0 %v715
      %823 = vmatpush1.msra.mxu0 %v714
      %824 = vmatprep.subr.mxu0 %v717
      %825 = vmatpush1.msra.mxu0 %v716
      %826 = vmatprep.subr.mxu0 %v719
      %827 = vmatpush1.msra.mxu0 %v718
      %828 = vmatprep.subr.mxu0 %v721
      %829 = vmatpush1.msra.mxu0 %v720
      %830 = vmatprep.subr.mxu0 %v723
      %831 = vmatpush1.msra.mxu0 %v722
      %832 = vmatprep.subr.mxu0 %v725
      %833 = vmatpush1.msra.mxu0 %v724
      %834 = vmatprep.subr.mxu0 %v727
      %835 = vmatpush1.msra.mxu0 %v726
      %836 = vmatprep.subr.mxu0 %v729
      %837 = vmatpush1.msra.mxu0 %v728
      %838 = vmatprep.subr.mxu0 %v731
      %839 = vmatpush1.msra.mxu0 %v730
      %840 = vmatprep.subr.mxu0 %v733
      %841 = vmatpush1.msra.mxu0 %v732
      %842 = vmatprep.subr.mxu0 %v735
      %843 = vmatpush1.msra.mxu0 %v734
      %844 = vmatprep.subr.mxu0 %v737
      %845 = vmatpush1.msra.mxu0 %v736
      %846 = vmatprep.subr.mxu0 %v739
      %847 = vmatpush1.msra.mxu0 %v738
      %848 = vmatprep.subr.mxu0 %v741
      %849 = vmatpush1.msra.mxu0 %v740
      %850 = vmatprep.subr.mxu0 %v743
      %851 = vmatpush1.msra.mxu0 %v742
      %852 = vmatprep.subr.mxu0 %v745
      %853 = vmatpush1.msra.mxu0 %v744
      %854 = vmatprep.subr.mxu0 %v747
      %855 = vmatpush1.msra.mxu0 %v746
      %856 = vmatprep.subr.mxu0 %v749
      %857 = vmatpush1.msra.mxu0 %v748
      %858 = vmatprep.subr.mxu0 %v751
      %859 = vmatpush1.msra.mxu0 %v750
      %860 = vmatprep.subr.mxu0 %v753
      %861 = vmatpush1.msra.mxu0 %v752
      %862 = vmatprep.mubr.f32.mxu0 %v667
      %863 = vmatmul.mubr.f32.gmra.mrb[0].mxu0 %v666
      %v864 = vpop.f32.mrb[0].mxu0
      %v865 = vadd.f32 %v791, %v864
      %v866 = vpop.f32.mrb[0].mxu0
      %v867 = vadd.f32 %v795, %v866
      %868 = vmatprep.mubr.f32.mxu0 %v670
      %869 = vmatmul.mubr.f32.gmra.mrb[0].mxu0 %v669
      %v870 = vpop.f32.mrb[0].mxu0
      %v871 = vadd.f32 %v791, %v870
      %v872 = vpop.f32.mrb[0].mxu0
      %v873 = vadd.f32 %v795, %v872
      %874 = vmatprep.mubr.f32.mxu0 %v673
      %875 = vmatmul.mubr.f32.gmra.mrb[0].mxu0 %v672
      %v876 = vpop.f32.mrb[0].mxu0
      %v877 = vadd.f32 %v791, %v876
      %v878 = vpop.f32.mrb[0].mxu0
      %v879 = vadd.f32 %v795, %v878
      %880 = vmatprep.mubr.f32.mxu0 %v676
      %881 = vmatmul.mubr.f32.gmra.mrb[0].mxu0 %v675
      %v882 = vpop.f32.mrb[0].mxu0
      %v883 = vadd.f32 %v791, %v882
      %v884 = vpop.f32.mrb[0].mxu0
      %v885 = vadd.f32 %v795, %v884
      %886 = vmatprep.mubr.f32.mxu0 %v679
      %887 = vmatmul.mubr.f32.gmra.mrb[0].mxu0 %v678
      %v888 = vpop.f32.mrb[0].mxu0
      %v889 = vadd.f32 %v791, %v888
      %v890 = vpop.f32.mrb[0].mxu0
      %v891 = vadd.f32 %v795, %v890
      %892 = vmatprep.mubr.f32.mxu0 %v682
      %893 = vmatmul.mubr.f32.gmra.mrb[0].mxu0 %v681
      %v894 = vpop.f32.mrb[0].mxu0
      %v895 = vadd.f32 %v791, %v894
      %v896 = vpop.f32.mrb[0].mxu0
      %v897 = vadd.f32 %v795, %v896
      %898 = vmatprep.mubr.f32.mxu0 %v685
      %899 = vmatmul.mubr.f32.gmra.mrb[0].mxu0 %v684
      %v900 = vpop.f32.mrb[0].mxu0
      %v901 = vadd.f32 %v791, %v900
      %v902 = vpop.f32.mrb[0].mxu0
      %v903 = vadd.f32 %v795, %v902
      %904 = vmatprep.mubr.f32.mxu0 %v688
      %905 = vmatmul.mubr.f32.gmra.mrb[0].mxu0 %v687
      %v906 = vpop.f32.mrb[0].mxu0
      %v907 = vadd.f32 %v791, %v906
      %v908 = vpop.f32.mrb[0].mxu0
      %v909 = vadd.f32 %v795, %v908
      %910 = vdwg.mxu0
      %911 = vmatprep.subr.mxu0 %v755
      %912 = vmatpush1.msra.mxu0 %v754
      %913 = vmatprep.subr.mxu0 %v757
      %914 = vmatpush1.msra.mxu0 %v756
      %915 = vmatprep.subr.mxu0 %v759
      %916 = vmatpush1.msra.mxu0 %v758
      %917 = vmatprep.subr.mxu0 %v761
      %918 = vmatpush1.msra.mxu0 %v760
      %919 = vmatprep.subr.mxu0 %v763
      %920 = vmatpush1.msra.mxu0 %v762
      %921 = vmatprep.subr.mxu0 %v765
      %922 = vmatpush1.msra.mxu0 %v764
      %923 = vmatprep.subr.mxu0 %v767
      %924 = vmatpush1.msra.mxu0 %v766
      %925 = vmatprep.subr.mxu0 %v769
      %926 = vmatpush1.msra.mxu0 %v768
      %927 = vmatprep.subr.mxu0 %v771
      %928 = vmatpush1.msra.mxu0 %v770
      %929 = vmatprep.subr.mxu0 %v773
      %930 = vmatpush1.msra.mxu0 %v772
      %931 = vmatprep.subr.mxu0 %v775
      %932 = vmatpush1.msra.mxu0 %v774
      %933 = vmatprep.subr.mxu0 %v777
      %934 = vmatpush1.msra.mxu0 %v776
      %935 = vmatprep.subr.mxu0 %v779
      %936 = vmatpush1.msra.mxu0 %v778
      %937 = vmatprep.subr.mxu0 %v781
      %938 = vmatpush1.msra.mxu0 %v780
      %939 = vmatprep.subr.mxu0 %v783
      %940 = vmatpush1.msra.mxu0 %v782
      %941 = vmatprep.subr.mxu0 %v785
      %942 = vmatpush1.msra.mxu0 %v784
      %943 = vmatprep.subr.mxu0 0.0
      %944 = vmatpush1.msra.mxu0 0.0
      %945 = vmatprep.subr.mxu0 0.0
      %946 = vmatpush1.msra.mxu0 0.0
      %947 = vmatprep.subr.mxu0 0.0
      %948 = vmatpush1.msra.mxu0 0.0
      %949 = vmatprep.subr.mxu0 0.0
      %950 = vmatpush1.msra.mxu0 0.0
      %951 = vmatprep.subr.mxu0 0.0
      %952 = vmatpush1.msra.mxu0 0.0
      %953 = vmatprep.subr.mxu0 0.0
      %954 = vmatpush1.msra.mxu0 0.0
      %955 = vmatprep.subr.mxu0 0.0
      %956 = vmatpush1.msra.mxu0 0.0
      %957 = vmatprep.subr.mxu0 0.0
      %958 = vmatpush1.msra.mxu0 0.0
      %959 = vmatprep.subr.mxu0 0.0
      %960 = vmatpush1.msra.mxu0 0.0
      %961 = vmatprep.subr.mxu0 0.0
      %962 = vmatpush1.msra.mxu0 0.0
      %963 = vmatprep.subr.mxu0 0.0
      %964 = vmatpush1.msra.mxu0 0.0
      %965 = vmatprep.subr.mxu0 0.0
      %966 = vmatpush1.msra.mxu0 0.0
      %967 = vmatprep.subr.mxu0 0.0
      %968 = vmatpush1.msra.mxu0 0.0
      %969 = vmatprep.subr.mxu0 0.0
      %970 = vmatpush1.msra.mxu0 0.0
      %971 = vmatprep.subr.mxu0 0.0
      %972 = vmatpush1.msra.mxu0 0.0
      %973 = vmatprep.subr.mxu0 0.0
      %974 = vmatpush1.msra.mxu0 0.0
      %975 = vmatprep.mubr.f32.mxu0 0.0
      %976 = vmatmul.mubr.f32.gmra.mrb[0].mxu0 %v668
      %v977 = vpop.f32.mrb[0].mxu0
      %v978 = vadd.f32 %v865, %v977
      %v979 = vpop.f32.mrb[0].mxu0
      %v980 = vadd.f32 %v867, %v979
      %981 = vmatprep.mubr.f32.mxu0 0.0
      %982 = vmatmul.mubr.f32.gmra.mrb[0].mxu0 %v671
      %v983 = vpop.f32.mrb[0].mxu0
      %v984 = vadd.f32 %v871, %v983
      %v985 = vpop.f32.mrb[0].mxu0
      %v986 = vadd.f32 %v873, %v985
      %987 = vmatprep.mubr.f32.mxu0 0.0
      %988 = vmatmul.mubr.f32.gmra.mrb[0].mxu0 %v674
      %v989 = vpop.f32.mrb[0].mxu0
      %v990 = vadd.f32 %v877, %v989
      %v991 = vpop.f32.mrb[0].mxu0
      %v992 = vadd.f32 %v879, %v991
      %993 = vmatprep.mubr.f32.mxu0 0.0
      %994 = vmatmul.mubr.f32.gmra.mrb[0].mxu0 %v677
      %v995 = vpop.f32.mrb[0].mxu0
      %v996 = vadd.f32 %v883, %v995
      %v997 = vpop.f32.mrb[0].mxu0
      %v998 = vadd.f32 %v885, %v997
      %999 = vmatprep.mubr.f32.mxu0 0.0
      %1000 = vmatmul.mubr.f32.gmra.mrb[0].mxu0 %v680
      %v1001 = vpop.f32.mrb[0].mxu0
      %v1002 = vadd.f32 %v889, %v1001
      %v1003 = vpop.f32.mrb[0].mxu0
      %v1004 = vadd.f32 %v891, %v1003
      %1005 = vmatprep.mubr.f32.mxu0 0.0
      %1006 = vmatmul.mubr.f32.gmra.mrb[0].mxu0 %v683
      %v1007 = vpop.f32.mrb[0].mxu0
      %v1008 = vadd.f32 %v895, %v1007
      %v1009 = vpop.f32.mrb[0].mxu0
      %v1010 = vadd.f32 %v897, %v1009
      %1011 = vmatprep.mubr.f32.mxu0 0.0
      %1012 = vmatmul.mubr.f32.gmra.mrb[0].mxu0 %v686
      %v1013 = vpop.f32.mrb[0].mxu0
      %v1014 = vadd.f32 %v901, %v1013
      %v1015 = vpop.f32.mrb[0].mxu0
      %v1016 = vadd.f32 %v903, %v1015
      %1017 = vmatprep.mubr.f32.mxu0 0.0
      %1018 = vmatmul.mubr.f32.gmra.mrb[0].mxu0 %v689
      %v1019 = vpop.f32.mrb[0].mxu0
      %v1020 = vadd.f32 %v907, %v1019
      %v1021 = vpop.f32.mrb[0].mxu0
      %v1022 = vadd.f32 %v909, %v1021
      %1023 = vdwg.mxu0
      %1024 = vst [vmem:[%s231] sm:$0xff] %v978
      %1025 = vst [vmem:[%s231 + $0x8] sm:$0xff] %v980
      %1026 = vst [vmem:[%s231 + $0x10] sm:$0xff] %v984
      %1027 = vst [vmem:[%s231 + $0x18] sm:$0xff] %v986
      %1028 = vst [vmem:[%s231 + $0x20] sm:$0xff] %v990
      %1029 = vst [vmem:[%s231 + $0x28] sm:$0xff] %v992
      %1030 = vst [vmem:[%s231 + $0x30] sm:$0xff] %v996
      %1031 = vst [vmem:[%s231 + $0x38] sm:$0xff] %v998
      %1032 = vst [vmem:[%s231 + $0x40] sm:$0xff] %v1002
      %1033 = vst [vmem:[%s231 + $0x48] sm:$0xff] %v1004
      %1034 = vst [vmem:[%s231 + $0x50] sm:$0xff] %v1008
      %1035 = vst [vmem:[%s231 + $0x58] sm:$0xff] %v1010
      %1036 = vst [vmem:[%s231 + $0x60] sm:$0xff] %v1014
      %1037 = vst [vmem:[%s231 + $0x68] sm:$0xff] %v1016
      %1038 = vst [vmem:[%s231 + $0x70] sm:$0xff] %v1020
      %1039 = vst [vmem:[%s231 + $0x78] sm:$0xff] %v1022
      %s1040 = smul.u32 2, %s16
      %p1041 = scmp.lt.s32.totalorder %s1040, 3
      %s1042 = scalar_select %p1041, %s1040, 3
      %s1043 = smul.addr %s1042, 8
      %s1044 = smul.addr %s1043, 8
      %s1045 = scalar_lea.vmem %s5, %s1044
      // Predicated region
      $region41: #{_upconv_apply.1} parent=39 // pred_check
        %p1046 = pneg %p144
      $region42: #{_upconv_apply.1} parent=39 // pred_check_branch
        %1048 = sbr.rel (%p1046) target = $region44
      $region43: #{_upconv_apply.1} parent=39 // pred_region
        %s1049 = smul.u32 2, %s16
      $region44: #{_upconv_apply.1} parent=39 // pred_fallthru
        _
    $region40: #{_upconv_apply.1} parent=5 // pred_fallthru
      _
    %p1050 = scmp.le.s32.totalorder 2, %s11
    // Predicated region
    $region45: #{_upconv_apply.1} parent=5 // pred_check
      %p1051 = pneg %p1050
    $region46: #{_upconv_apply.1} parent=5 // pred_check_branch
      %1053 = sbr.rel (%p1051) target = $region48
    $region47: #{_upconv_apply.1} parent=5 // pred_region
      %s1054 = ssub.s32 %s11, 2
      // Predicated region
      $region49: #{_upconv_apply.1} parent=47 // pred_check
        %p1055 = pneg %p150
      $region50: #{_upconv_apply.1} parent=47 // pred_check_branch
        %1057 = sbr.rel (%p1055) target = $region52
      $region51: #{_upconv_apply.1} parent=47 // pred_region
        %s1058 = smul.u32 2, %s17
        %p1059 = scmp.lt.s32.totalorder %s1058, 3
        %s1060 = scalar_select %p1059, %s1058, 3
        %s1061 = smul.addr %s1060, 8
        %s1062 = smul.addr %s1061, 8
        %s1063 = scalar_lea.vmem %s5, %s1062
      $region52: #{_upconv_apply.1} parent=47 // pred_fallthru
        _
    $region48: #{_upconv_apply.1} parent=5 // pred_fallthru
      _
  $region6: #{_upconv_apply.1} parent=0 // loop_footer
    %s15 = sadd.s32 1, %s11
  $region7: #{_upconv_apply.1} parent=0 // loop_footer_branch
    %10 = sbr.rel target = $region3
  $region8: #{_upconv_apply.1} parent=0 // loop_exit
    _

</llo_original>
